<compile_context>
chip_gen: v5e
topology: v5e:2x2
jax: 0.10.0
libtpu: 0.0.40
codegen_flags: <defaults>
</compile_context>

<pallas_src>
import functools

import jax
import jax.numpy as jnp
from jax.experimental import pallas as pl
from jax.experimental.pallas import tpu as pltpu


def _round_up(a, m):
    return (a + m - 1) // m * m


def _i32(v):
    """Python int -> int32 constant with two's-complement wrap."""
    v &= 0xFFFFFFFF
    if v & 0x80000000:
        v -= 1 << 32
    return jnp.int32(v)


def _sublayer_connection_kernel(seed_ref, x_ref, w_ref, b_ref, o_ref, *,
                                eps, p, training, d_true):
    x = x_ref[...].astype(jnp.float32)              # (tm, Dp), f32 elementwise path
    tm, d_pad = x.shape
    padded = d_pad != d_true

    # --- LayerNorm statistics over the true D features only (masked if padded)
    if padded:
        lane = jax.lax.broadcasted_iota(jnp.int32, (tm, d_pad), 1)
        feat_mask = lane < d_true
        xv = jnp.where(feat_mask, x, 0.0)
    else:
        xv = x
    mean = jnp.sum(xv, axis=-1, keepdims=True) * (1.0 / d_true)
    xc = x - mean
    xcv = jnp.where(feat_mask, xc, 0.0) if padded else xc
    # Annotated-Transformer LayerNorm: unbiased std (N-1), eps added to std.
    var = jnp.sum(xcv * xcv, axis=-1, keepdims=True) * (1.0 / (d_true - 1))
    inv = 1.0 / (jnp.sqrt(var) + eps)               # (tm, 1): one divide per row
    xn = xc * inv                                    # gamma/beta folded into W'/b'

    # --- Linear(D, D): bf16 MXU operands, f32 accumulate -------------------
    y = jnp.dot(xn.astype(jnp.bfloat16), w_ref[...],
                preferred_element_type=jnp.float32)
    y = y + b_ref[...]

    # --- dropout (inverted, training only): int32 hash -> 24-bit uniform ---
    if training and p > 0.0:
        keep_scale = jnp.float32(1.0 / (1.0 - p))
        thresh = jnp.int32(int(round(p * float(1 << 24))))
        m31 = jnp.int32(0x7FFFFFFF)
        r = jax.lax.broadcasted_iota(jnp.int32, (tm, d_pad), 0)
        c = jax.lax.broadcasted_iota(jnp.int32, (tm, d_pad), 1)
        gr = r + pl.program_id(0) * tm              # global row index
        z = seed_ref[0] + gr * _i32(0x9E3779B1) + c * _i32(0x85EBCA77)
        z = z ^ ((z & m31) >> 16)                   # murmur-style finalizer
        z = z * _i32(0x7FEB352D)                    # (wrapping int32 mults,
        z = z ^ ((z & m31) >> 15)                   #  logical shifts via &m31)
        z = z * _i32(0x846CA68B)
        z = z ^ ((z & m31) >> 16)
        bits = (z & m31) >> 7                       # uniform in [0, 2^24)
        keep = bits >= thresh                       # P(keep) = 1 - p
        y = jnp.where(keep, y * keep_scale, jnp.float32(0.0))

    # --- residual connection ------------------------------------------------
    o_ref[...] = (x + y).astype(o_ref.dtype)


def sublayer_connection(x, w, b, gamma, beta, seed, *, p=0.1, training=True,
                        eps=1e-6, tm=256):
    """x: [B, S, D]; w: [D, D]; b/gamma/beta: [1, D]; seed: int32[1]."""
    assert 0.0 <= p < 1.0
    B, S, D = x.shape
    rows = B * S

    Dp = _round_up(D, 128)                          # lane-dense feature axis
    tm_eff = min(_round_up(tm, 8), _round_up(rows, 8))
    rows_p = _round_up(rows, tm_eff)

    x2 = x.reshape(rows, D)
    if rows_p != rows or Dp != D:
        x2 = jnp.pad(x2, ((0, rows_p - rows), (0, Dp - D)))

    # Fold the LayerNorm affine params into the linear layer (one-time, free):
    #   (xn*gamma + beta) @ W + b == xn @ (gamma[:,None]*W) + (beta @ W + b)
    w_fold = (gamma.reshape(D, 1).astype(jnp.float32) * w.astype(jnp.float32))
    b_fold = (beta.reshape(1, D).astype(jnp.float32) @ w.astype(jnp.float32)
              + b.reshape(1, D).astype(jnp.float32))
    if Dp != D:
        w_fold = jnp.pad(w_fold, ((0, Dp - D), (0, Dp - D)))
        b_fold = jnp.pad(b_fold, ((0, 0), (0, Dp - D)))
    w_bf16 = w_fold.astype(jnp.bfloat16)            # MXU-native weight dtype

    kernel = functools.partial(_sublayer_connection_kernel,
                               eps=eps, p=p, training=training, d_true=D)

    out = pl.pallas_call(
        kernel,
        out_shape=jax.ShapeDtypeStruct((rows_p, Dp), x.dtype),
        grid_spec=pltpu.PrefetchScalarGridSpec(
            num_scalar_prefetch=1,                  # seed lives in SMEM
            grid=(rows_p // tm_eff,),
            in_specs=[
                pl.BlockSpec((tm_eff, Dp), lambda i, seed: (i, 0)),  # x tile
                pl.BlockSpec((Dp, Dp), lambda i, seed: (0, 0)),      # folded W (bf16)
                pl.BlockSpec((1, Dp), lambda i, seed: (0, 0)),       # folded bias
            ],
            out_specs=pl.BlockSpec((tm_eff, Dp), lambda i, seed: (i, 0)),
        ),
        compiler_params=pltpu.CompilerParams(
            dimension_semantics=("parallel",),      # row tiles independent -> v7x 2 TC
            vmem_limit_bytes=64 * 1024 * 1024,
        ),
    )(seed, x2, w_bf16, b_fold)

    return out[:rows, :D].reshape(B, S, D)


def _reference(x, w, b, gamma, beta, eps):
    """Pure-JAX reference (eval mode, no dropout)."""
    mean = jnp.mean(x, axis=-1, keepdims=True)
    xc = x - mean
    var = jnp.sum(xc * xc, axis=-1, keepdims=True) / (x.shape[-1] - 1)
    normed = gamma * xc / (jnp.sqrt(var) + eps) + beta
    return x + (normed @ w + b)


if __name__ == "__main__":
    B, S, D = 2, 8, 32
    key = jax.random.PRNGKey(0)
    kx, kw, kb = jax.random.split(key, 3)

    x = jax.random.normal(kx, (B, S, D), dtype=jnp.float32)
    w = jax.random.normal(kw, (D, D), dtype=jnp.float32) / jnp.sqrt(jnp.float32(D))
    b = jax.random.normal(kb, (1, D), dtype=jnp.float32) * 0.01
    gamma = jnp.ones((1, D), jnp.float32)            # LayerNorm.a_2 init = ones
    beta = jnp.zeros((1, D), jnp.float32)            # LayerNorm.b_2 init = zeros
    seed = jnp.array([0], dtype=jnp.int32)

    # Eval-mode correctness check vs. pure-JAX reference (bf16 matmul tolerance).
    out_eval = sublayer_connection(x, w, b, gamma, beta, seed,
                                   p=0.1, training=False)
    jax.block_until_ready(out_eval)
    ref = _reference(x, w, b, gamma, beta, 1e-6)
    assert jnp.allclose(out_eval, ref, atol=5e-2, rtol=5e-2)

    # Training-mode run (fused dropout active).
    out = sublayer_connection(x, w, b, gamma, beta, seed, p=0.1, training=True)
    jax.block_until_ready(out)
    assert out.shape == (B, S, D) and out.dtype == x.dtype
    print("KERNEL_OK")
</pallas_src>

<mosaic_0001>
module attributes {stable_mosaic.version = 11 : i64} {
  func.func @_sublayer_connection_kernel(%arg0: i32, %arg1: memref<1xi32, #tpu.memory_space<smem>>, %arg2: memref<16x128xf32, #tpu.memory_space<vmem>>, %arg3: memref<128x128xbf16, #tpu.memory_space<vmem>>, %arg4: memref<1x128xf32, #tpu.memory_space<vmem>>, %arg5: memref<16x128xf32, #tpu.memory_space<vmem>>) attributes {dimension_semantics = [#tpu.dimension_semantics<parallel>], iteration_bounds = array<i64: 1>, scalar_prefetch = 1 : i64, scratch_operands = 0 : i64, tpu.core_type = #tpu.core_type<tc>, window_params = [{transform_indices = @transform_0, window_bounds = array<i64: 16, 128>}, {pipeline_mode = #tpu.pipeline_mode<synchronous>, transform_indices = @transform_1, window_bounds = array<i64: 128, 128>}, {pipeline_mode = #tpu.pipeline_mode<synchronous>, transform_indices = @transform_2, window_bounds = array<i64: 1, 128>}, {transform_indices = @transform_3, window_bounds = array<i64: 16, 128>}]} {
    %c0 = arith.constant 0 : index
    %c0_0 = arith.constant 0 : index
    %0 = vector.load %arg2[%c0, %c0_0] : memref<16x128xf32, #tpu.memory_space<vmem>>, vector<16x128xf32>
    %1 = tpu.iota {dimensions = array<i32: 1>} : vector<16x128xi32>
    %c32_i32 = arith.constant 32 : i32
    %2 = vector.broadcast %c32_i32 : i32 to vector<16x128xi32>
    %3 = arith.cmpi slt, %1, %2 : vector<16x128xi32>
    %cst = arith.constant 0.000000e+00 : f32
    %4 = vector.broadcast %cst : f32 to vector<16x128xf32>
    %5 = arith.select %3, %0, %4 : vector<16x128xi1>, vector<16x128xf32>
    %cst_1 = arith.constant dense<0.000000e+00> : vector<16xf32>
    %6 = vector.multi_reduction <add>, %5, %cst_1 [1] : vector<16x128xf32> to vector<16xf32>
    %7 = vector.shape_cast %6 : vector<16xf32> to vector<16x1xf32>
    %cst_2 = arith.constant 3.125000e-02 : f32
    %8 = vector.broadcast %cst_2 : f32 to vector<16x1xf32>
    %9 = arith.mulf %7, %8 : vector<16x1xf32>
    %10 = vector.broadcast %9 : vector<16x1xf32> to vector<16x128xf32>
    %11 = arith.subf %0, %10 : vector<16x128xf32>
    %cst_3 = arith.constant 0.000000e+00 : f32
    %12 = vector.broadcast %cst_3 : f32 to vector<16x128xf32>
    %13 = arith.select %3, %11, %12 : vector<16x128xi1>, vector<16x128xf32>
    %14 = arith.mulf %13, %13 : vector<16x128xf32>
    %cst_4 = arith.constant dense<0.000000e+00> : vector<16xf32>
    %15 = vector.multi_reduction <add>, %14, %cst_4 [1] : vector<16x128xf32> to vector<16xf32>
    %16 = vector.shape_cast %15 : vector<16xf32> to vector<16x1xf32>
    %cst_5 = arith.constant 0.0322580636 : f32
    %17 = vector.broadcast %cst_5 : f32 to vector<16x1xf32>
    %18 = arith.mulf %16, %17 : vector<16x1xf32>
    %19 = math.sqrt %18 : vector<16x1xf32>
    %cst_6 = arith.constant 9.99999997E-7 : f32
    %20 = vector.broadcast %cst_6 : f32 to vector<16x1xf32>
    %21 = arith.addf %19, %20 : vector<16x1xf32>
    %cst_7 = arith.constant 1.000000e+00 : f32
    %22 = vector.broadcast %cst_7 : f32 to vector<16x1xf32>
    %23 = arith.divf %22, %21 : vector<16x1xf32>
    %24 = vector.broadcast %23 : vector<16x1xf32> to vector<16x128xf32>
    %25 = arith.mulf %11, %24 : vector<16x128xf32>
    %26 = arith.truncf %25 : vector<16x128xf32> to vector<16x128xbf16>
    %c0_8 = arith.constant 0 : index
    %c0_9 = arith.constant 0 : index
    %27 = vector.load %arg3[%c0_8, %c0_9] : memref<128x128xbf16, #tpu.memory_space<vmem>>, vector<128x128xbf16>
    %cst_10 = arith.constant dense<0.000000e+00> : vector<16x128xf32>
    %28 = tpu.matmul %26, %27, %cst_10 {dimension_numbers = #tpu.dot_dimension_numbers<[1], [0], [0], [1], [0, 0, 1, 1], [], []>} : vector<16x128xbf16>, vector<128x128xbf16>, vector<16x128xf32> -> vector<16x128xf32>
    %c0_11 = arith.constant 0 : index
    %c0_12 = arith.constant 0 : index
    %29 = vector.load %arg4[%c0_11, %c0_12] : memref<1x128xf32, #tpu.memory_space<vmem>>, vector<1x128xf32>
    %30 = vector.broadcast %29 : vector<1x128xf32> to vector<16x128xf32>
    %31 = arith.addf %28, %30 : vector<16x128xf32>
    %32 = arith.addf %0, %31 : vector<16x128xf32>
    %c0_13 = arith.constant 0 : index
    %c0_14 = arith.constant 0 : index
    %33 = vector.load %arg5[%c0_13, %c0_14] : memref<16x128xf32, #tpu.memory_space<vmem>>, vector<16x128xf32>
    tpu.vector_store %arg5[%c0_13, %c0_14], %32 {strides = array<i32>} : memref<16x128xf32, #tpu.memory_space<vmem>>, vector<16x128xf32>,
    return
  }
  func.func @transform_0(%arg0: i32, %arg1: memref<1xi32, #tpu.memory_space<smem>>) -> (i32, i32) {
    %c0_i32 = arith.constant 0 : i32
    %c0_i32_0 = arith.constant 0 : i32
    return %arg0, %c0_i32 : i32, i32
  }
  func.func @transform_1(%arg0: i32, %arg1: memref<1xi32, #tpu.memory_space<smem>>) -> (i32, i32) {
    %c0_i32 = arith.constant 0 : i32
    %c0_i32_0 = arith.constant 0 : i32
    %c0_i32_1 = arith.constant 0 : i32
    return %c0_i32, %c0_i32_0 : i32, i32
  }
  func.func @transform_2(%arg0: i32, %arg1: memref<1xi32, #tpu.memory_space<smem>>) -> (i32, i32) {
    %c0_i32 = arith.constant 0 : i32
    %c0_i32_0 = arith.constant 0 : i32
    %c0_i32_1 = arith.constant 0 : i32
    return %c0_i32, %c0_i32_0 : i32, i32
  }
  func.func @transform_3(%arg0: i32, %arg1: memref<1xi32, #tpu.memory_space<smem>>) -> (i32, i32) {
    %c0_i32 = arith.constant 0 : i32
    %c0_i32_0 = arith.constant 0 : i32
    return %arg0, %c0_i32 : i32, i32
  }
}

</mosaic_0001>

<llo_original>
// kernel: tpu_custom_call.1
$region0: #{tpu_custom_call.1}
  #allocation0 [shape = 'u32[]', space=smem, size = 0x4, offset = 0x4, fixed_abs, tag = 'smem constant byte address 0x4 - core index']
  #allocation1 [shape = 'u32[72,128]{1,0:T(1,128)}', space=vmem, size = 0x9000, scoped, tag = 'internal scratch']
  #allocation2 [shape = 's32[1]{0}', space=sflag, size = 0x4, scoped, tag = 'scoped memory for tpu_custom_call.1']
  #allocation3 [shape = 's32[1]{0:T(128)S(6)}', space=smem, size = 0x200, scoped, tag = 'prefetched SMEM operand 0']
  %s0 = inlined_call_operand.<no memory space> [shape: s32[1], index: 0, kind: input, shape index: {}]
  %s1 = inlined_call_operand.hbm [shape: f32[16,128], index: 1, kind: input, shape index: {}]
  %s2 = inlined_call_operand.hbm [shape: bf16[128,128], index: 2, kind: input, shape index: {}]
  %s3 = inlined_call_operand.vmem [shape: f32[1,128], index: 3, kind: input, shape index: {}]
  %s4 = inlined_call_operand.hbm [shape: f32[16,128], index: 4, kind: output, shape index: {}]
  %s5 = sld [smem:[#allocation0]]
  $region30: #{tpu_custom_call.1} parent=0
    _
  %s7 = ssub.s32 1, %s5
  %s8 = scalar_select 0, %s7, %s5
  %9 = sst [smem:[#allocation3]] %s0
  $region1: #{tpu_custom_call.1} parent=0
    #allocation4 [shape = 'u8[8192]{0}', space=vmem, size = 0x2000, scoped, tag = 'input window, operand 1, single buffered']
    #allocation5 [shape = 's32[1]{0}', space=sflag, size = 0x4, scoped, tag = 'scoped memory for tpu_custom_call.1']
    #allocation6 [shape = 's32[1]{0}', space=sflag, size = 0x4, scoped, tag = 'scoped memory for tpu_custom_call.1']
    #allocation7 [shape = 'u8[32768]{0}', space=vmem, size = 0x8000, scoped, tag = 'input window, operand 2, single buffered']
    #allocation8 [shape = 's32[1]{0}', space=sflag, size = 0x4, scoped, tag = 'scoped memory for tpu_custom_call.1']
    #allocation9 [shape = 'u8[8192]{0}', space=vmem, size = 0x2000, scoped, tag = 'output window, operand 0, single buffered']
    %10 = vsyncpa [#allocation5], 0
    %11 = vsyncpa [#allocation8], 0
    %12 = vsyncpa [#allocation6], 0
    // Predicated region
    $region2: #{tpu_custom_call.1} parent=1 // pred_check
      _
    $region3: #{tpu_custom_call.1} parent=1 // pred_check_branch
      %14 = sbr.rel (0) target = $region5
    $region4: #{tpu_custom_call.1} parent=1 // pred_region
      %16 = vsyncadd [#allocation5], 0
      %s17 = sshll.u32 %s1, 4
      %s18 = int_to_ptr.hbm [resolvable:$true] %s17
      %s19 = sshll.u32 [#allocation4], 4
      %s20 = int_to_ptr.vmem [resolvable:$true] %s19
      %25 = dma.hbm_to_vmem [thread:$0]  %s18, 256, %s20, [#allocation5], 128, 128, 8
    $region5: #{tpu_custom_call.1} parent=1 // pred_fallthru
      _
    // Predicated region
    $region6: #{tpu_custom_call.1} parent=1 // pred_check
      _
    $region7: #{tpu_custom_call.1} parent=1 // pred_check_branch
      %27 = sbr.rel (0) target = $region9
    $region8: #{tpu_custom_call.1} parent=1 // pred_region
      %29 = vsyncadd [#allocation8], 0
      %s30 = sshll.u32 %s2, 4
      %s31 = int_to_ptr.hbm [resolvable:$true] %s30
      %s32 = sshll.u32 [#allocation7], 4
      %s33 = int_to_ptr.vmem [resolvable:$true] %s32
      %38 = dma.hbm_to_vmem [thread:$0]  %s31, 1024, %s33, [#allocation8], 64, 64, 4
    $region9: #{tpu_custom_call.1} parent=1 // pred_fallthru
      _
    // Predicated region
    $region10: #{tpu_custom_call.1} parent=1 // pred_check
      _
    $region11: #{tpu_custom_call.1} parent=1 // pred_check_branch
      %40 = sbr.rel (0) target = $region13
    $region12: #{tpu_custom_call.1} parent=1 // pred_region
      _
    $region13: #{tpu_custom_call.1} parent=1 // pred_fallthru
      _
    // Predicated region
    $region14: #{tpu_custom_call.1} parent=1 // pred_check
      _
    $region15: #{tpu_custom_call.1} parent=1 // pred_check_branch
      %42 = sbr.rel (0) target = $region17
    $region16: #{tpu_custom_call.1} parent=1 // pred_region
      %44 = dma.done [#allocation5], 256
    $region17: #{tpu_custom_call.1} parent=1 // pred_fallthru
      _
    // Predicated region
    $region18: #{tpu_custom_call.1} parent=1 // pred_check
      _
    $region19: #{tpu_custom_call.1} parent=1 // pred_check_branch
      %46 = sbr.rel (0) target = $region21
    $region20: #{tpu_custom_call.1} parent=1 // pred_region
      %48 = dma.done [#allocation8], 1024
    $region21: #{tpu_custom_call.1} parent=1 // pred_fallthru
      _
    %v49 = vld [vmem:[#allocation4] sm:$0xff]
    %v50 = vld [vmem:[#allocation4 + $0x8] sm:$0xff]
    %v51 = vlaneseq
    %v52 = vand.u32 %v51, 127
    %vm53 = vcmp.lt.s32.totalorder %v52, 32
    %v54 = vsel %vm53, %v49, 0.0
    %v55 = vsel %vm53, %v50, 0.0
    %56 = vadd.xlane.f32.xlu0 %v54
    %v57 = vpop.xlane.xlu0 %56
    %58 = vadd.xlane.f32.xlu0 %v55
    %v59 = vpop.xlane.xlu0 %58
    %v60 = vmul.f32 %v57, 0.03125
    %v61 = vmul.f32 %v59, 0.03125
    %v62 = vsub.f32 %v49, %v60
    %v63 = vsub.f32 %v50, %v61
    %v64 = vsel %vm53, %v62, 0.0
    %v65 = vsel %vm53, %v63, 0.0
    %v66 = vmul.f32 %v64, %v64
    %v67 = vmul.f32 %v65, %v65
    %68 = vadd.xlane.f32.xlu0 %v66
    %v69 = vpop.xlane.xlu0 %68
    %70 = vadd.xlane.f32.xlu0 %v67
    %v71 = vpop.xlane.xlu0 %70
    %v72 = vmul.f32 %v69, 0.032258064
    %v73 = vmul.f32 %v71, 0.032258064
    %v74 = vrsqrt.pop %v72
    %v75 = vmul.f32 %v74, %v72
    %v76 = vmul.f32 %v75, %v74
    %v77 = vmul.f32 0.5, %v76
    %v78 = vsub.f32 1.5, %v77
    %v79 = vmul.f32 %v74, %v78
    %v80 = vmul.f32 %v72, %v79
    %vm81 = vcmp.eq.f32.partialorder %v72, inf
    %v82 = vsel %vm81, %v72, %v80
    %vm83 = vcmp.eq.f32.partialorder %v72, 0.0
    %v84 = vand.u32 %v72, 2147483648
    %v85 = vsel %vm83, %v84, %v82
    %v86 = vrsqrt.pop %v73
    %v87 = vmul.f32 %v86, %v73
    %v88 = vmul.f32 %v87, %v86
    %v89 = vmul.f32 0.5, %v88
    %v90 = vsub.f32 1.5, %v89
    %v91 = vmul.f32 %v86, %v90
    %v92 = vmul.f32 %v73, %v91
    %vm93 = vcmp.eq.f32.partialorder %v73, inf
    %v94 = vsel %vm93, %v73, %v92
    %vm95 = vcmp.eq.f32.partialorder %v73, 0.0
    %v96 = vand.u32 %v73, 2147483648
    %v97 = vsel %vm95, %v96, %v94
    %v98 = vadd.f32 %v85, 1e-06
    %v99 = vadd.f32 %v97, 1e-06
    %v100 = vrcp.pop %v98
    %v101 = vmul.f32 %v98, %v100
    %v102 = vsub.f32 1.0, %v101
    %v103 = vmul.f32 %v100, %v102
    %v104 = vadd.f32 %v100, %v103
    %vm105 = vweird.f32 %v98
    %vm106 = vweird.f32 %v100
    %vm107 = vmor %vm105, %vm106
    %v108 = vsel %vm107, %v100, %v104
    %v109 = vand.u32 2147483647, %v98
    %vm110 = vcmp.eq.f32.partialorder %v109, 8.507059e+37
    %v111 = vand.u32 %v98, 2147483648
    %v112 = vor.u32 1.1754944e-38, %v111
    %v113 = vsel %vm110, %v112, %v108
    %v114 = vmul.f32 1.0, %v113
    %v115 = vrcp.pop %v99
    %v116 = vmul.f32 %v99, %v115
    %v117 = vsub.f32 1.0, %v116
    %v118 = vmul.f32 %v115, %v117
    %v119 = vadd.f32 %v115, %v118
    %vm120 = vweird.f32 %v99
    %vm121 = vweird.f32 %v115
    %vm122 = vmor %vm120, %vm121
    %v123 = vsel %vm122, %v115, %v119
    %v124 = vand.u32 2147483647, %v99
    %vm125 = vcmp.eq.f32.partialorder %v124, 8.507059e+37
    %v126 = vand.u32 %v99, 2147483648
    %v127 = vor.u32 1.1754944e-38, %v126
    %v128 = vsel %vm125, %v127, %v123
    %v129 = vmul.f32 1.0, %v128
    %v130 = vmul.f32 %v62, %v114
    %v131 = vmul.f32 %v63, %v129
    %v132 = vpack.c.bf16 %v131, %v130
    %v133 = vld [vmem:[#allocation7] sm:$0xf]
    %v134 = vld [vmem:[#allocation7 + $0x4] sm:$0xf]
    %v135 = vld [vmem:[#allocation7 + $0x8] sm:$0xf]
    %v136 = vld [vmem:[#allocation7 + $0xc] sm:$0xf]
    %v137 = vld [vmem:[#allocation7 + $0x10] sm:$0xf]
    %v138 = vld [vmem:[#allocation7 + $0x14] sm:$0xf]
    %v139 = vld [vmem:[#allocation7 + $0x18] sm:$0xf]
    %v140 = vld [vmem:[#allocation7 + $0x1c] sm:$0xf]
    %v141 = vld [vmem:[#allocation7 + $0x20] sm:$0xf]
    %v142 = vld [vmem:[#allocation7 + $0x24] sm:$0xf]
    %v143 = vld [vmem:[#allocation7 + $0x28] sm:$0xf]
    %v144 = vld [vmem:[#allocation7 + $0x2c] sm:$0xf]
    %v145 = vld [vmem:[#allocation7 + $0x30] sm:$0xf]
    %v146 = vld [vmem:[#allocation7 + $0x34] sm:$0xf]
    %v147 = vld [vmem:[#allocation7 + $0x38] sm:$0xf]
    %v148 = vld [vmem:[#allocation7 + $0x3c] sm:$0xf]
    %v149 = vld [vmem:[%s3] sm:$0x1]
    %v151 = vperm.slane %v149, 0
    %v169 = vunpack.c.l.b16 %v133
    %v170 = vunpack.c.l.b16 %v134
    %v171 = vunpack.c.l.b16 %v135
    %v172 = vunpack.c.l.b16 %v136
    %v173 = vunpack.c.l.b16 %v137
    %v174 = vunpack.c.l.b16 %v138
    %v175 = vunpack.c.l.b16 %v139
    %v176 = vunpack.c.l.b16 %v140
    %v177 = vunpack.c.l.b16 %v141
    %v178 = vunpack.c.l.b16 %v142
    %v179 = vunpack.c.l.b16 %v143
    %v180 = vunpack.c.l.b16 %v144
    %v181 = vunpack.c.l.b16 %v145
    %v182 = vunpack.c.l.b16 %v146
    %v183 = vunpack.c.l.b16 %v147
    %v184 = vunpack.c.l.b16 %v148
    %v185 = vpack.c.b16 %v170, %v169
    %v186 = vpack.c.b16 %v172, %v171
    %v187 = vpack.c.b16 %v174, %v173
    %v188 = vpack.c.b16 %v176, %v175
    %v189 = vpack.c.b16 %v178, %v177
    %v190 = vpack.c.b16 %v180, %v179
    %v191 = vpack.c.b16 %v182, %v181
    %v192 = vpack.c.b16 %v184, %v183
    %201 = vmatpush.bf16.msra.mxu0 %v192
    %202 = vmatpush.bf16.msra.mxu0 %v191
    %203 = vmatpush.bf16.msra.mxu0 %v190
    %204 = vmatpush.bf16.msra.mxu0 %v189
    %205 = vmatpush.bf16.msra.mxu0 %v188
    %206 = vmatpush.bf16.msra.mxu0 %v187
    %207 = vmatpush.bf16.msra.mxu0 %v186
    %208 = vmatpush.bf16.msra.mxu0 %v185
    %209 = vmatmul.bf16.gmra.mxu0 %v132
    %v210 = vpop.f32.mrf.mxu0
    %v211 = vadd.f32 %v151, %v210
    %v212 = vpop.f32.mrf.mxu0
    %v213 = vadd.f32 %v151, %v212
    %214 = vdwg.mxu0
    %v215 = vadd.f32 %v49, %v211
    %v216 = vadd.f32 %v50, %v213
    %217 = vst [vmem:[#allocation9] sm:$0xff] %v215
    %218 = vst [vmem:[#allocation9 + $0x8] sm:$0xff] %v216
    // Predicated region
    $region22: #{tpu_custom_call.1} parent=1 // pred_check
      _
    $region23: #{tpu_custom_call.1} parent=1 // pred_check_branch
      %220 = sbr.rel (0) target = $region25
    $region24: #{tpu_custom_call.1} parent=1 // pred_region
      %222 = vsyncadd [#allocation6], 0
      %s223 = sshll.u32 [#allocation9], 4
      %s224 = int_to_ptr.vmem [resolvable:$true] %s223
      %s225 = sshll.u32 %s4, 4
      %s226 = int_to_ptr.hbm [resolvable:$true] %s225
      %231 = dma.vmem_to_hbm [thread:$0]  %s224, 256, %s226, [#allocation6], 128, 128, 8
    $region25: #{tpu_custom_call.1} parent=1 // pred_fallthru
      _
    // Predicated region
    $region26: #{tpu_custom_call.1} parent=1 // pred_check
      _
    $region27: #{tpu_custom_call.1} parent=1 // pred_check_branch
      %233 = sbr.rel (0) target = $region29
    $region28: #{tpu_custom_call.1} parent=1 // pred_region
      %235 = dma.done [#allocation6], 256
    $region29: #{tpu_custom_call.1} parent=1 // pred_fallthru
      _
    %236 = vsyncpa [#allocation5], 1
    %237 = vsyncpa [#allocation8], 1
    %238 = vsyncpa [#allocation6], 1

</llo_original>
